<compile_context>
chip_gen: v6e
topology: v6e:2x2x1
jax: 0.10.0
libtpu: 0.0.40
codegen_flags: <defaults>
</compile_context>

<pallas_src>
import jax
import jax.numpy as jnp
from jax import lax
from jax.experimental import pallas as pl
from jax.experimental.pallas import tpu as pltpu


def _round_up(x, m):
    return (x + m - 1) // m * m


def _event_parts_seq_kernel(emb_ref, hid0_ref, w_emb_ref, w_hid_ref, b_ref,
                            out_ref, hid_ref):
    """One grid step = one timestep of the recurrence.

    emb_ref : (B_pad, H)      this step's embedded tokens (streamed per step)
    hid0_ref: (B_pad, H)      initial hidden state (VMEM-resident, read at t=0)
    w_*_ref : (H, n_pad)      split-K halves of the fused [i2h | i2o] weight
    b_ref   : (1, n_pad)      fused [b_i2h | b_i2o] bias (lane-padded)
    out_ref : (B_pad, n_pad)  this step's slab: cols [0:H]=hidden', [H:H+O]=out
    hid_ref : (B_pad, H)      VMEM scratch carrying hidden across grid steps
    """
    t = pl.program_id(0)
    H = hid_ref.shape[-1]

    @pl.when(t == 0)
    def _():
        hid_ref[...] = hid0_ref[...]

    # Split-K fused matmul (no lane concat): columns [0:H] -> hidden',
    # [H:H+O] -> output, remaining lanes are zero padding.
    y = (jnp.dot(emb_ref[...], w_emb_ref[...],
                 preferred_element_type=jnp.float32)
         + jnp.dot(hid_ref[...], w_hid_ref[...],
                   preferred_element_type=jnp.float32)
         + b_ref[...])
    y = jnp.maximum(y, 0.0)

    out_ref[...] = y                 # single lane-dense unmasked store
    hid_ref[...] = y[:, :H]          # carry hidden' to the next grid step
    # TODO(synk): training-mode dropout(p=0.1) on the i2o columns would use
    # pltpu.prng_seed + pltpu.stateful_bernoulli; eval mode is identity.


def prepare_kernel_params(params):
    """One-time parameter prep (model-load time, not per step)."""
    H = params["b_i2h"].shape[-1]
    O = params["b_i2o"].shape[-1]
    n = H + O
    n_pad = _round_up(n, 128)
    w_fused = jnp.concatenate([params["w_i2h_t"], params["w_i2o_t"]], axis=1)
    w_fused = jnp.pad(w_fused, ((0, 0), (0, n_pad - n))).astype(jnp.float32)
    b_fused = jnp.concatenate([params["b_i2h"], params["b_i2o"]], axis=1)
    b_fused = jnp.pad(b_fused, ((0, 0), (0, n_pad - n))).astype(jnp.float32)
    # TODO(synk): once H/O reach a few hundred, cast weights/embedding to
    # bfloat16 here (v6e/v7x MXU path) and keep f32 accumulation in-kernel.
    return {
        "embedding": params["embedding"].astype(jnp.float32),  # (V, H)
        "w_emb": w_fused[:H],     # (H, n_pad) — multiplies the embedding half
        "w_hid": w_fused[H:],     # (H, n_pad) — multiplies the hidden half
        "b_fused": b_fused,       # (1, n_pad)
        "hidden_size": H,
        "output_size": O,
    }


def event_parts_forward_sequence(token_seq, hidden0, kparams):
    """Fused recurrence over a whole sequence.

    token_seq: (T, B) int token ids
    hidden0  : (B, H) initial hidden state
    Returns (outputs (T, B, O), hidden_final (B, H)).
    """
    H = kparams["hidden_size"]
    O = kparams["output_size"]
    n_pad = kparams["b_fused"].shape[-1]
    T, B = token_seq.shape
    B_pad = _round_up(max(B, 8), 8)

    # Whole-sequence embedding gather + padding: done ONCE per sequence.
    emb_seq = jnp.take(kparams["embedding"], token_seq.astype(jnp.int32),
                       axis=0).astype(jnp.float32)              # (T, B, H)
    emb_seq = jnp.pad(emb_seq, ((0, 0), (0, B_pad - B), (0, 0)))
    hid0 = jnp.pad(hidden0.astype(jnp.float32), ((0, B_pad - B), (0, 0)))

    grid_spec = pltpu.PrefetchScalarGridSpec(
        num_scalar_prefetch=0,
        grid=(T,),
        in_specs=[
            # Streamed per step (double-buffered DMA handled by Pallas).
            pl.BlockSpec((None, B_pad, H), lambda t: (t, 0, 0)),
            # Resident operands: constant index_map -> DMA once, stay in VMEM.
            pl.BlockSpec((B_pad, H), lambda t: (0, 0)),
            pl.BlockSpec((H, n_pad), lambda t: (0, 0)),
            pl.BlockSpec((H, n_pad), lambda t: (0, 0)),
            pl.BlockSpec((1, n_pad), lambda t: (0, 0)),
        ],
        out_specs=pl.BlockSpec((None, B_pad, n_pad), lambda t: (t, 0, 0)),
        scratch_shapes=[pltpu.VMEM((B_pad, H), jnp.float32)],   # hidden carry
    )

    slab = pl.pallas_call(
        _event_parts_seq_kernel,
        out_shape=jax.ShapeDtypeStruct((T, B_pad, n_pad), jnp.float32),
        grid_spec=grid_spec,
        # T is a true recurrence -> "arbitrary".
        # TODO(synk): on v7x add a leading "parallel" grid axis over batch
        # tiles once B_pad spans multiple tiles so both TensorCores are busy.
        compiler_params=pltpu.CompilerParams(
            dimension_semantics=("arbitrary",)),
    )(emb_seq, hid0, kparams["w_emb"], kparams["w_hid"], kparams["b_fused"])

    outputs = slab[:, :B, H:H + O]          # (T, B, O)
    hidden_final = slab[T - 1, :B, :H]      # (B, H)
    return outputs, hidden_final


def event_parts_forward(token_ids, hidden, kparams):
    """Single-step API matching the PyTorch forward: returns (output, hidden')."""
    outputs, hidden_new = event_parts_forward_sequence(
        token_ids[None, :], hidden, kparams)
    return outputs[0], hidden_new


def init_params(key, input_size, hidden_size, output_size):
    k_emb, k_wh, k_bh, k_wo, k_bo = jax.random.split(key, 5)
    scale = 0.1
    # Stored in the orientation the kernel consumes (in_features, out_features).
    return {
        "embedding": scale * jax.random.normal(
            k_emb, (input_size, hidden_size), jnp.float32),
        "w_i2h_t": scale * jax.random.normal(
            k_wh, (2 * hidden_size, hidden_size), jnp.float32),
        "b_i2h": scale * jax.random.normal(k_bh, (1, hidden_size), jnp.float32),
        "w_i2o_t": scale * jax.random.normal(
            k_wo, (2 * hidden_size, output_size), jnp.float32),
        "b_i2o": scale * jax.random.normal(k_bo, (1, output_size), jnp.float32),
    }


def _reference_cell(params, token_ids, hidden):
    emb = jnp.take(params["embedding"], token_ids, axis=0)
    combined = jnp.concatenate([emb, hidden], axis=1)
    h = jnp.maximum(combined @ params["w_i2h_t"] + params["b_i2h"], 0.0)
    o = jnp.maximum(combined @ params["w_i2o_t"] + params["b_i2o"], 0.0)
    return o, h


def _reference_sequence(params, token_seq, hidden0):
    def step(h, tok):
        o, h_new = _reference_cell(params, tok, h)
        return h_new, o
    h_final, outs = lax.scan(step, hidden0, token_seq)
    return outs, h_final


if __name__ == "__main__":
    INPUT_SIZE = 64     # vocab size
    HIDDEN_SIZE = 32
    OUTPUT_SIZE = 16
    BATCH = 2
    SEQ_LEN = 8

    key = jax.random.PRNGKey(0)
    k_params, k_tok, k_hid = jax.random.split(key, 3)

    params = init_params(k_params, INPUT_SIZE, HIDDEN_SIZE, OUTPUT_SIZE)
    kparams = prepare_kernel_params(params)

    token_seq = jax.random.randint(
        k_tok, (SEQ_LEN, BATCH), 0, INPUT_SIZE, jnp.int32)
    hidden0 = jax.random.normal(k_hid, (BATCH, HIDDEN_SIZE), jnp.float32)

    # Fused-sequence kernel: one pallas_call for all SEQ_LEN timesteps.
    outs, hid_final = event_parts_forward_sequence(token_seq, hidden0, kparams)
    jax.block_until_ready((outs, hid_final))

    ref_outs, ref_hid = _reference_sequence(params, token_seq, hidden0)
    assert outs.shape == (SEQ_LEN, BATCH, OUTPUT_SIZE)
    assert hid_final.shape == (BATCH, HIDDEN_SIZE)
    assert jnp.allclose(outs, ref_outs, atol=1e-4, rtol=1e-3)
    assert jnp.allclose(hid_final, ref_hid, atol=1e-4, rtol=1e-3)

    # Single-step API (matches the PyTorch forward signature).
    out1, hid1 = event_parts_forward(token_seq[0], hidden0, kparams)
    jax.block_until_ready((out1, hid1))
    ref_out1, ref_hid1 = _reference_cell(params, token_seq[0], hidden0)
    assert out1.shape == (BATCH, OUTPUT_SIZE)
    assert hid1.shape == (BATCH, HIDDEN_SIZE)
    assert jnp.allclose(out1, ref_out1, atol=1e-4, rtol=1e-3)
    assert jnp.allclose(hid1, ref_hid1, atol=1e-4, rtol=1e-3)

    print("KERNEL_OK")
</pallas_src>

<mosaic_0001>
module attributes {stable_mosaic.version = 11 : i64} {
  func.func @_event_parts_seq_kernel(%arg0: i32, %arg1: memref<1x8x32xf32, #tpu.memory_space<vmem>>, %arg2: memref<8x32xf32, #tpu.memory_space<vmem>>, %arg3: memref<32x128xf32, #tpu.memory_space<vmem>>, %arg4: memref<32x128xf32, #tpu.memory_space<vmem>>, %arg5: memref<1x128xf32, #tpu.memory_space<vmem>>, %arg6: memref<1x8x128xf32, #tpu.memory_space<vmem>>, %arg7: memref<8x32xf32, #tpu.memory_space<vmem>>) attributes {dimension_semantics = [#tpu.dimension_semantics<arbitrary>], iteration_bounds = array<i64: 8>, scalar_prefetch = 0 : i64, scratch_operands = 1 : i64, tpu.core_type = #tpu.core_type<tc>, window_params = [{transform_indices = @transform_0, window_bounds = array<i64: 1, 8, 32>}, {pipeline_mode = #tpu.pipeline_mode<synchronous>, transform_indices = @transform_1, window_bounds = array<i64: 8, 32>}, {pipeline_mode = #tpu.pipeline_mode<synchronous>, transform_indices = @transform_2, window_bounds = array<i64: 32, 128>}, {pipeline_mode = #tpu.pipeline_mode<synchronous>, transform_indices = @transform_3, window_bounds = array<i64: 32, 128>}, {pipeline_mode = #tpu.pipeline_mode<synchronous>, transform_indices = @transform_4, window_bounds = array<i64: 1, 128>}, {transform_indices = @transform_5, window_bounds = array<i64: 1, 8, 128>}]} {
    %c0_i32 = arith.constant 0 : i32
    %0 = arith.cmpi eq, %arg0, %c0_i32 : i32
    %1 = arith.extui %0 : i1 to i32
    %c0_i32_0 = arith.constant 0 : i32
    %2 = arith.cmpi ne, %1, %c0_i32_0 : i32
    scf.if %2 {
      %c0_18 = arith.constant 0 : index
      %c0_19 = arith.constant 0 : index
      %21 = vector.load %arg2[%c0_18, %c0_19] : memref<8x32xf32, #tpu.memory_space<vmem>>, vector<8x32xf32>
      %c0_20 = arith.constant 0 : index
      %c0_21 = arith.constant 0 : index
      %22 = vector.load %arg7[%c0_20, %c0_21] : memref<8x32xf32, #tpu.memory_space<vmem>>, vector<8x32xf32>
      tpu.vector_store %arg7[%c0_20, %c0_21], %21 {strides = array<i32>} : memref<8x32xf32, #tpu.memory_space<vmem>>, vector<8x32xf32>,
    } else {
    }
    %c0 = arith.constant 0 : index
    %c0_1 = arith.constant 0 : index
    %c0_2 = arith.constant 0 : index
    %3 = vector.load %arg1[%c0, %c0_1, %c0_2] : memref<1x8x32xf32, #tpu.memory_space<vmem>>, vector<1x8x32xf32>
    %4 = vector.shape_cast %3 : vector<1x8x32xf32> to vector<8x32xf32>
    %c0_3 = arith.constant 0 : index
    %c0_4 = arith.constant 0 : index
    %5 = vector.load %arg3[%c0_3, %c0_4] : memref<32x128xf32, #tpu.memory_space<vmem>>, vector<32x128xf32>
    %cst = arith.constant dense<0.000000e+00> : vector<8x128xf32>
    %6 = tpu.matmul %4, %5, %cst {dimension_numbers = #tpu.dot_dimension_numbers<[1], [0], [0], [1], [0, 0, 1, 1], [], []>} : vector<8x32xf32>, vector<32x128xf32>, vector<8x128xf32> -> vector<8x128xf32>
    %c0_5 = arith.constant 0 : index
    %c0_6 = arith.constant 0 : index
    %7 = vector.load %arg7[%c0_5, %c0_6] : memref<8x32xf32, #tpu.memory_space<vmem>>, vector<8x32xf32>
    %c0_7 = arith.constant 0 : index
    %c0_8 = arith.constant 0 : index
    %8 = vector.load %arg4[%c0_7, %c0_8] : memref<32x128xf32, #tpu.memory_space<vmem>>, vector<32x128xf32>
    %cst_9 = arith.constant dense<0.000000e+00> : vector<8x128xf32>
    %9 = tpu.matmul %7, %8, %cst_9 {dimension_numbers = #tpu.dot_dimension_numbers<[1], [0], [0], [1], [0, 0, 1, 1], [], []>} : vector<8x32xf32>, vector<32x128xf32>, vector<8x128xf32> -> vector<8x128xf32>
    %10 = arith.addf %6, %9 : vector<8x128xf32>
    %c0_10 = arith.constant 0 : index
    %c0_11 = arith.constant 0 : index
    %11 = vector.load %arg5[%c0_10, %c0_11] : memref<1x128xf32, #tpu.memory_space<vmem>>, vector<1x128xf32>
    %12 = vector.broadcast %11 : vector<1x128xf32> to vector<8x128xf32>
    %13 = arith.addf %10, %12 : vector<8x128xf32>
    %cst_12 = arith.constant 0.000000e+00 : f32
    %14 = vector.broadcast %cst_12 : f32 to vector<8x128xf32>
    %15 = arith.maximumf %13, %14 : vector<8x128xf32>
    %c0_13 = arith.constant 0 : index
    %c0_14 = arith.constant 0 : index
    %c0_15 = arith.constant 0 : index
    %16 = vector.load %arg6[%c0_13, %c0_14, %c0_15] : memref<1x8x128xf32, #tpu.memory_space<vmem>>, vector<1x8x128xf32>
    %17 = vector.shape_cast %16 : vector<1x8x128xf32> to vector<8x128xf32>
    %18 = vector.shape_cast %15 : vector<8x128xf32> to vector<1x8x128xf32>
    tpu.vector_store %arg6[%c0_13, %c0_14, %c0_15], %18 {strides = array<i32>} : memref<1x8x128xf32, #tpu.memory_space<vmem>>, vector<1x8x128xf32>,
    %19 = vector.extract_strided_slice %15 {offsets = [0, 0], sizes = [8, 32], strides = [1, 1]} : vector<8x128xf32> to vector<8x32xf32>
    %c0_16 = arith.constant 0 : index
    %c0_17 = arith.constant 0 : index
    %20 = vector.load %arg7[%c0_16, %c0_17] : memref<8x32xf32, #tpu.memory_space<vmem>>, vector<8x32xf32>
    tpu.vector_store %arg7[%c0_16, %c0_17], %19 {strides = array<i32>} : memref<8x32xf32, #tpu.memory_space<vmem>>, vector<8x32xf32>,
    return
  }
  func.func @transform_0(%arg0: i32) -> (i32, i32, i32) {
    %c0_i32 = arith.constant 0 : i32
    %c0_i32_0 = arith.constant 0 : i32
    %c0_i32_1 = arith.constant 0 : i32
    return %arg0, %c0_i32, %c0_i32_0 : i32, i32, i32
  }
  func.func @transform_1(%arg0: i32) -> (i32, i32) {
    %c0_i32 = arith.constant 0 : i32
    %c0_i32_0 = arith.constant 0 : i32
    %c0_i32_1 = arith.constant 0 : i32
    return %c0_i32, %c0_i32_0 : i32, i32
  }
  func.func @transform_2(%arg0: i32) -> (i32, i32) {
    %c0_i32 = arith.constant 0 : i32
    %c0_i32_0 = arith.constant 0 : i32
    %c0_i32_1 = arith.constant 0 : i32
    return %c0_i32, %c0_i32_0 : i32, i32
  }
  func.func @transform_3(%arg0: i32) -> (i32, i32) {
    %c0_i32 = arith.constant 0 : i32
    %c0_i32_0 = arith.constant 0 : i32
    %c0_i32_1 = arith.constant 0 : i32
    return %c0_i32, %c0_i32_0 : i32, i32
  }
  func.func @transform_4(%arg0: i32) -> (i32, i32) {
    %c0_i32 = arith.constant 0 : i32
    %c0_i32_0 = arith.constant 0 : i32
    %c0_i32_1 = arith.constant 0 : i32
    return %c0_i32, %c0_i32_0 : i32, i32
  }
  func.func @transform_5(%arg0: i32) -> (i32, i32, i32) {
    %c0_i32 = arith.constant 0 : i32
    %c0_i32_0 = arith.constant 0 : i32
    %c0_i32_1 = arith.constant 0 : i32
    return %arg0, %c0_i32, %c0_i32_0 : i32, i32, i32
  }
}

</mosaic_0001>

<llo_original>
// kernel: tpu_custom_call.1
$region0: #{tpu_custom_call.1}
  #allocation0 [shape = 'u32[]', space=smem, size = 0x4, offset = 0x4, fixed_abs, tag = 'smem constant byte address 0x4 - core index']
  #allocation1 [shape = 'u32[144,128]{1,0:T(1,128)}', space=vmem, size = 0x12000, scoped, tag = 'internal scratch']
  #allocation2 [shape = 'f32[8,32]{1,0:T(8,128)}', space=vmem, size = 0x1000, scoped, tag = 'scratch operand']
  %s0 = inlined_call_operand.hbm [shape: f32[8,8,32], index: 0, kind: input, shape index: {}]
  %s1 = inlined_call_operand.hbm [shape: f32[8,32], index: 1, kind: input, shape index: {}]
  %s2 = inlined_call_operand.hbm [shape: f32[32,128], index: 2, kind: input, shape index: {}]
  %s3 = inlined_call_operand.hbm [shape: f32[32,128], index: 3, kind: input, shape index: {}]
  %s4 = inlined_call_operand.vmem [shape: f32[1,128], index: 4, kind: input, shape index: {}]
  %s5 = inlined_call_operand.hbm [shape: f32[8,8,128], index: 5, kind: output, shape index: {}]
  %s6 = sld [smem:[#allocation0]]
  $region73: #{tpu_custom_call.1} parent=0
    _
  %s8 = ssub.s32 1, %s6
  %s9 = scalar_select 0, %s8, %s6
  $region1: #{tpu_custom_call.1} parent=0
    #allocation3 [shape = 'u8[8192]{0}', space=vmem, size = 0x2000, scoped, tag = 'input window, operand 0']
    #allocation4 [shape = 's32[2]{0}', space=sflag, size = 0x8, scoped, tag = 'scoped memory for tpu_custom_call.1']
    #allocation5 [shape = 's32[2]{0}', space=sflag, size = 0x8, scoped, tag = 'scoped memory for tpu_custom_call.1']
    #allocation6 [shape = 'u8[4096]{0}', space=vmem, size = 0x1000, scoped, tag = 'input window, operand 1, single buffered']
    #allocation7 [shape = 's32[1]{0}', space=sflag, size = 0x4, scoped, tag = 'scoped memory for tpu_custom_call.1']
    #allocation8 [shape = 'u8[16384]{0}', space=vmem, size = 0x4000, scoped, tag = 'input window, operand 2, single buffered']
    #allocation9 [shape = 'u8[16384]{0}', space=vmem, size = 0x4000, scoped, tag = 'input window, operand 3, single buffered']
    #allocation10 [shape = 's32[1]{0}', space=sflag, size = 0x4, scoped, tag = 'scoped memory for tpu_custom_call.1']
    #allocation11 [shape = 'u8[8192]{0}', space=vmem, size = 0x2000, scoped, tag = 'output window, operand 0']
    %10 = vsyncpa [#allocation4], 0
    %s11 = scalar_lea.sflag [#allocation4], 1
    %12 = vsyncpa %s11, 0
    %13 = vsyncpa [#allocation7], 0
    %14 = vsyncpa [#allocation10], 0
    %15 = vsyncpa [#allocation5], 0
    %s16 = scalar_lea.sflag [#allocation5], 1
    %17 = vsyncpa %s16, 0
    loop: start=0, step=1, limit=10
    $region2: #{tpu_custom_call.1} parent=1 // loop_pre_header
      _
    $region3: #{tpu_custom_call.1} parent=1 // loop_header
      %s19 = sphi 0, %s23
      %p20 = scmp.ge.s32.totalorder %s19, 10
      %s29 = sphi 0, %s31
      %s32 = sphi 0, %s29
      %s33 = sphi 0, %s32
      %s49 = sphi 0, %s33
      %s53 = sphi 0, %s53
      %s55 = sphi 0, %s53
      %s56 = sphi 0, %s55
      %s70 = sphi 0, %s56
      %s74 = sphi 0, %s74
      %s76 = sphi 0, %s74
      %s77 = sphi 0, %s76
      %s91 = sphi 0, %s77
      %s95 = sphi 0, %s95
      %s97 = sphi 0, %s95
      %s98 = sphi 0, %s97
      %s112 = sphi 0, %s98
      %s116 = sphi 0, %s116
      %s118 = sphi 0, %s116
      %s119 = sphi 0, %s118
      %s133 = sphi 0, %s119
      %s139 = sphi 0, %s141
      %s142 = sphi 0, %s139
      %s143 = sphi 0, %s142
      %s159 = sphi 0, %s143
    $region4: #{tpu_custom_call.1} parent=1 // loop_header_branch
      %22 = sbr.rel (%p20) target = $region8
    $region5: #{tpu_custom_call.1} parent=1 // loop_body
      %s24 = ssub.s32 %s19, 1
      %s25 = ssub.s32 %s19, 2
      %s26 = sadd.s32 %s19, 1
      %s27 = ssub.s32 %s19, %s26
      %p28 = scmp.eq.s32.totalorder %s27, 0
      %s30 = sadd.s32 %s29, 1
      %s31 = scalar_select %p28, %s29, %s30
      %p34 = pneg %p28
      %p35 = scmp.eq.s32.totalorder %s19, 7
      %p36 = por %p34, %p35
      %p37 = scmp.ne.s32.totalorder %s29, %s32
      %p38 = scmp.eq.s32.totalorder %s19, 0
      %p39 = por %p37, %p38
      %p40 = scmp.ne.s32.totalorder %s29, %s32
      %p41 = scmp.eq.s32.totalorder %s24, 7
      %p42 = por %p40, %p41
      %p43 = scmp.ne.s32.totalorder %s32, %s33
      %p44 = scmp.eq.s32.totalorder %s24, 0
      %p45 = por %p43, %p44
      %p46 = scmp.ne.s32.totalorder %s32, %s33
      %p47 = scmp.eq.s32.totalorder %s25, 7
      %p48 = por %p46, %p47
      %p50 = scmp.ne.s32.totalorder %s33, %s49
      %p51 = scmp.eq.s32.totalorder %s25, 0
      %p52 = por %p50, %p51
      %s54 = sadd.s32 %s53, 1
      %p57 = scmp.eq.s32.totalorder %s19, 7
      %p58 = scmp.ne.s32.totalorder %s53, %s55
      %p59 = scmp.eq.s32.totalorder %s19, 0
      %p60 = por %p58, %p59
      %p61 = scmp.ne.s32.totalorder %s53, %s55
      %p62 = scmp.eq.s32.totalorder %s24, 7
      %p63 = por %p61, %p62
      %p64 = scmp.ne.s32.totalorder %s55, %s56
      %p65 = scmp.eq.s32.totalorder %s24, 0
      %p66 = por %p64, %p65
      %p67 = scmp.ne.s32.totalorder %s55, %s56
      %p68 = scmp.eq.s32.totalorder %s25, 7
      %p69 = por %p67, %p68
      %p71 = scmp.ne.s32.totalorder %s56, %s70
      %p72 = scmp.eq.s32.totalorder %s25, 0
      %p73 = por %p71, %p72
      %s75 = sadd.s32 %s74, 1
      %p78 = scmp.eq.s32.totalorder %s19, 7
      %p79 = scmp.ne.s32.totalorder %s74, %s76
      %p80 = scmp.eq.s32.totalorder %s19, 0
      %p81 = por %p79, %p80
      %p82 = scmp.ne.s32.totalorder %s74, %s76
      %p83 = scmp.eq.s32.totalorder %s24, 7
      %p84 = por %p82, %p83
      %p85 = scmp.ne.s32.totalorder %s76, %s77
      %p86 = scmp.eq.s32.totalorder %s24, 0
      %p87 = por %p85, %p86
      %p88 = scmp.ne.s32.totalorder %s76, %s77
      %p89 = scmp.eq.s32.totalorder %s25, 7
      %p90 = por %p88, %p89
      %p92 = scmp.ne.s32.totalorder %s77, %s91
      %p93 = scmp.eq.s32.totalorder %s25, 0
      %p94 = por %p92, %p93
      %s96 = sadd.s32 %s95, 1
      %p99 = scmp.eq.s32.totalorder %s19, 7
      %p100 = scmp.ne.s32.totalorder %s95, %s97
      %p101 = scmp.eq.s32.totalorder %s19, 0
      %p102 = por %p100, %p101
      %p103 = scmp.ne.s32.totalorder %s95, %s97
      %p104 = scmp.eq.s32.totalorder %s24, 7
      %p105 = por %p103, %p104
      %p106 = scmp.ne.s32.totalorder %s97, %s98
      %p107 = scmp.eq.s32.totalorder %s24, 0
      %p108 = por %p106, %p107
      %p109 = scmp.ne.s32.totalorder %s97, %s98
      %p110 = scmp.eq.s32.totalorder %s25, 7
      %p111 = por %p109, %p110
      %p113 = scmp.ne.s32.totalorder %s98, %s112
      %p114 = scmp.eq.s32.totalorder %s25, 0
      %p115 = por %p113, %p114
      %s117 = sadd.s32 %s116, 1
      %p120 = scmp.eq.s32.totalorder %s19, 7
      %p121 = scmp.ne.s32.totalorder %s116, %s118
      %p122 = scmp.eq.s32.totalorder %s19, 0
      %p123 = por %p121, %p122
      %p124 = scmp.ne.s32.totalorder %s116, %s118
      %p125 = scmp.eq.s32.totalorder %s24, 7
      %p126 = por %p124, %p125
      %p127 = scmp.ne.s32.totalorder %s118, %s119
      %p128 = scmp.eq.s32.totalorder %s24, 0
      %p129 = por %p127, %p128
      %p130 = scmp.ne.s32.totalorder %s118, %s119
      %p131 = scmp.eq.s32.totalorder %s25, 7
      %p132 = por %p130, %p131
      %p134 = scmp.ne.s32.totalorder %s119, %s133
      %p135 = scmp.eq.s32.totalorder %s25, 0
      %p136 = por %p134, %p135
      %s137 = ssub.s32 %s19, %s26
      %p138 = scmp.eq.s32.totalorder %s137, 0
      %s140 = sadd.s32 %s139, 1
      %s141 = scalar_select %p138, %s139, %s140
      %p144 = pneg %p138
      %p145 = scmp.eq.s32.totalorder %s19, 7
      %p146 = por %p144, %p145
      %p147 = scmp.ne.s32.totalorder %s139, %s142
      %p148 = scmp.eq.s32.totalorder %s19, 0
      %p149 = por %p147, %p148
      %p150 = scmp.ne.s32.totalorder %s139, %s142
      %p151 = scmp.eq.s32.totalorder %s24, 7
      %p152 = por %p150, %p151
      %p153 = scmp.ne.s32.totalorder %s142, %s143
      %p154 = scmp.eq.s32.totalorder %s24, 0
      %p155 = por %p153, %p154
      %p156 = scmp.ne.s32.totalorder %s142, %s143
      %p157 = scmp.eq.s32.totalorder %s25, 7
      %p158 = por %p156, %p157
      %p160 = scmp.ne.s32.totalorder %s143, %s159
      %p161 = scmp.eq.s32.totalorder %s25, 0
      %p162 = por %p160, %p161
      %p163 = scmp.le.s32.totalorder 1, %s19
      %p164 = scmp.lt.s32.totalorder %s19, 9
      %p165 = pnand %p163, %p164
      %p166 = pneg %p165
      // Predicated region
      $region9: #{tpu_custom_call.1} parent=5 // pred_check
        _
      $region10: #{tpu_custom_call.1} parent=5 // pred_check_branch
        %168 = sbr.rel (%p165) target = $region12
      $region11: #{tpu_custom_call.1} parent=5 // pred_region
        %s169 = ssub.s32 %s19, 1
        // Predicated region
        $region13: #{tpu_custom_call.1} parent=11 // pred_check
          %p170 = pneg %p66
        $region14: #{tpu_custom_call.1} parent=11 // pred_check_branch
          %172 = sbr.rel (%p170) target = $region16
        $region15: #{tpu_custom_call.1} parent=11 // pred_region
          %s174 = ssub.s32 128, 128
          %175 = vsyncadd [#allocation7], %s174
          %s177 = sshll.u32 [#allocation6], 4
          %s178 = int_to_ptr.vmem [resolvable:$true] %s177
          %180 = dma.hbm_to_vmem [thread:$0]  %s1, 128, %s178, [#allocation7]
        $region16: #{tpu_custom_call.1} parent=11 // pred_fallthru
          _
        // Predicated region
        $region17: #{tpu_custom_call.1} parent=11 // pred_check
          %p181 = pneg %p87
        $region18: #{tpu_custom_call.1} parent=11 // pred_check_branch
          %183 = sbr.rel (%p181) target = $region20
        $region19: #{tpu_custom_call.1} parent=11 // pred_region
          %s185 = ssub.s32 512, 512
          %186 = vsyncadd [#allocation7], %s185
          %s187 = sshll.u32 [#allocation8], 4
          %s188 = int_to_ptr.vmem [resolvable:$true] %s187
          %193 = dma.hbm_to_vmem [thread:$0]  %s2, 512, %s188, [#allocation7], 128, 128, 8
        $region20: #{tpu_custom_call.1} parent=11 // pred_fallthru
          _
        // Predicated region
        $region21: #{tpu_custom_call.1} parent=11 // pred_check
          %p194 = pneg %p108
        $region22: #{tpu_custom_call.1} parent=11 // pred_check_branch
          %196 = sbr.rel (%p194) target = $region24
        $region23: #{tpu_custom_call.1} parent=11 // pred_region
          %s198 = ssub.s32 512, 512
          %199 = vsyncadd [#allocation10], %s198
          %s200 = sshll.u32 [#allocation9], 4
          %s201 = int_to_ptr.vmem [resolvable:$true] %s200
          %206 = dma.hbm_to_vmem [thread:$0]  %s3, 512, %s201, [#allocation10], 128, 128, 8
        $region24: #{tpu_custom_call.1} parent=11 // pred_fallthru
          _
        // Predicated region
        $region25: #{tpu_custom_call.1} parent=11 // pred_check
          %p207 = pneg %p129
        $region26: #{tpu_custom_call.1} parent=11 // pred_check_branch
          %209 = sbr.rel (%p207) target = $region28
        $region27: #{tpu_custom_call.1} parent=11 // pred_region
          _
        $region28: #{tpu_custom_call.1} parent=11 // pred_fallthru
          _
      $region12: #{tpu_custom_call.1} parent=5 // pred_fallthru
        _
      %p210 = scmp.lt.s32.totalorder %s19, 8
      // Predicated region
      $region29: #{tpu_custom_call.1} parent=5 // pred_check
        %p211 = pneg %p210
      $region30: #{tpu_custom_call.1} parent=5 // pred_check_branch
        %213 = sbr.rel (%p211) target = $region32
      $region31: #{tpu_custom_call.1} parent=5 // pred_region
        // Predicated region
        $region33: #{tpu_custom_call.1} parent=31 // pred_check
          %p214 = pneg %p39
        $region34: #{tpu_custom_call.1} parent=31 // pred_check_branch
          %216 = sbr.rel (%p214) target = $region36
        $region35: #{tpu_custom_call.1} parent=31 // pred_region
          %s217 = sand.u32 %s29, 1
          %s218 = scalar_lea.sflag [#allocation4], %s217
          %s219 = sand.u32 %s29, 1
          %s220 = smul.addr %s219, 8
          %s221 = scalar_lea.vmem [#allocation3], %s220
          %s223 = ssub.s32 128, 128
          %224 = vsyncadd %s218, %s223
          %s225 = smul.addr %s19, 128
          %s226 = scalar_lea.hbm %s0, %s225
          %s228 = sshll.u32 %s221, 4
          %s229 = int_to_ptr.vmem [resolvable:$true] %s228
          %231 = dma.hbm_to_vmem [thread:$0]  %s226, 128, %s229, %s218
        $region36: #{tpu_custom_call.1} parent=31 // pred_fallthru
          _
      $region32: #{tpu_custom_call.1} parent=5 // pred_fallthru
        _
      %p232 = scmp.le.s32.totalorder 1, %s19
      %p233 = scmp.lt.s32.totalorder %s19, 9
      %p234 = pnand %p232, %p233
      %p235 = pneg %p234
      // Predicated region
      $region37: #{tpu_custom_call.1} parent=5 // pred_check
        _
      $region38: #{tpu_custom_call.1} parent=5 // pred_check_branch
        %237 = sbr.rel (%p234) target = $region40
      $region39: #{tpu_custom_call.1} parent=5 // pred_region
        %s238 = ssub.s32 %s19, 1
        %s239 = sand.u32 %s32, 1
        %s240 = scalar_lea.sflag [#allocation4], %s239
        %s241 = sand.u32 %s32, 1
        %s242 = smul.addr %s241, 8
        %s243 = scalar_lea.vmem [#allocation3], %s242
        // Predicated region
        $region41: #{tpu_custom_call.1} parent=39 // pred_check
          %p244 = pneg %p45
        $region42: #{tpu_custom_call.1} parent=39 // pred_check_branch
          %246 = sbr.rel (%p244) target = $region44
        $region43: #{tpu_custom_call.1} parent=39 // pred_region
          %247 = dma.done %s240, 128
        $region44: #{tpu_custom_call.1} parent=39 // pred_fallthru
          _
        // Predicated region
        $region45: #{tpu_custom_call.1} parent=39 // pred_check
          %p248 = pneg %p66
        $region46: #{tpu_custom_call.1} parent=39 // pred_check_branch
          %250 = sbr.rel (%p248) target = $region48
        $region47: #{tpu_custom_call.1} parent=39 // pred_region
          %251 = dma.done [#allocation7], 128
        $region48: #{tpu_custom_call.1} parent=39 // pred_fallthru
          _
        // Predicated region
        $region49: #{tpu_custom_call.1} parent=39 // pred_check
          %p252 = pneg %p87
        $region50: #{tpu_custom_call.1} parent=39 // pred_check_branch
          %254 = sbr.rel (%p252) target = $region52
        $region51: #{tpu_custom_call.1} parent=39 // pred_region
          %255 = dma.done [#allocation7], 512
        $region52: #{tpu_custom_call.1} parent=39 // pred_fallthru
          _
        // Predicated region
        $region53: #{tpu_custom_call.1} parent=39 // pred_check
          %p256 = pneg %p108
        $region54: #{tpu_custom_call.1} parent=39 // pred_check_branch
          %258 = sbr.rel (%p256) target = $region56
        $region55: #{tpu_custom_call.1} parent=39 // pred_region
          %259 = dma.done [#allocation10], 512
        $region56: #{tpu_custom_call.1} parent=39 // pred_fallthru
          _
        %s260 = sand.u32 %s32, 1
        %s261 = scalar_lea.sflag [#allocation4], %s260
        %s262 = sand.u32 %s32, 1
        %s263 = smul.addr %s262, 8
        %s264 = scalar_lea.vmem [#allocation3], %s263
        %p265 = pneg %p45
        %p266 = pneg %p42
        %p267 = pneg %p66
        %p268 = pneg %p63
        %p269 = pneg %p87
        %p270 = pneg %p84
        %p271 = pneg %p108
        %p272 = pneg %p105
        %p273 = pneg %p129
        %p274 = pneg %p126
        %p275 = pneg %p155
        %p276 = pneg %p152
        %s277 = sand.u32 %s142, 1
        %s278 = scalar_lea.sflag [#allocation5], %s277
        %s279 = sand.u32 %s142, 1
        %s280 = smul.addr %s279, 8
        %s281 = scalar_lea.vmem [#allocation11], %s280
        %p282 = scmp.eq.s32.totalorder %s24, 0
        // Predicated region
        $region57: #{tpu_custom_call.1} parent=39 // pred_check
          %p283 = pneg %p282
        $region58: #{tpu_custom_call.1} parent=39 // pred_check_branch
          %285 = sbr.rel (%p283) target = $region60
        $region59: #{tpu_custom_call.1} parent=39 // pred_region
          %v286 = vld [vmem:[#allocation6] sm:$0xff]
          %vm287 = vcmask 261120
          %288 = vst.msk [vmem:[#allocation2] sm:$0xff] %vm287, %v286
        $region60: #{tpu_custom_call.1} parent=39 // pred_fallthru
          _
        %v289 = vld [vmem:[%s243] sm:$0xff]
        %v290 = vld [vmem:[#allocation8] sm:$0xff]
        %v291 = vld [vmem:[#allocation8 + $0x8] sm:$0xff]
        %v292 = vld [vmem:[#allocation8 + $0x10] sm:$0xff]
        %v293 = vld [vmem:[#allocation8 + $0x18] sm:$0xff]
        %v294 = vld [vmem:[#allocation2] sm:$0xff]
        %v295 = vld [vmem:[#allocation9] sm:$0xff]
        %v296 = vld [vmem:[#allocation9 + $0x8] sm:$0xff]
        %v297 = vld [vmem:[#allocation9 + $0x10] sm:$0xff]
        %v298 = vld [vmem:[#allocation9 + $0x18] sm:$0xff]
        %vm299 = vcmask 261120
        %v301 = vsel %vm299, %v294, 0
        %303 = vmatprep.subr.mxu0 0.0
        %304 = vmatpush1.msra.mxu0 0.0
        %305 = vmatprep.subr.mxu0 0.0
        %306 = vmatpush1.msra.mxu0 0.0
        %307 = vmatprep.subr.mxu0 0.0
        %308 = vmatpush1.msra.mxu0 0.0
        %309 = vmatprep.subr.mxu0 0.0
        %310 = vmatpush1.msra.mxu0 0.0
        %311 = vmatprep.subr.mxu0 0.0
        %312 = vmatpush1.msra.mxu0 0.0
        %313 = vmatprep.subr.mxu0 0.0
        %314 = vmatpush1.msra.mxu0 0.0
        %315 = vmatprep.subr.mxu0 0.0
        %316 = vmatpush1.msra.mxu0 0.0
        %317 = vmatprep.subr.mxu0 0.0
        %318 = vmatpush1.msra.mxu0 0.0
        %319 = vmatprep.subr.mxu0 0.0
        %320 = vmatpush1.msra.mxu0 0.0
        %321 = vmatprep.subr.mxu0 0.0
        %322 = vmatpush1.msra.mxu0 0.0
        %323 = vmatprep.subr.mxu0 0.0
        %324 = vmatpush1.msra.mxu0 0.0
        %325 = vmatprep.subr.mxu0 0.0
        %326 = vmatpush1.msra.mxu0 0.0
        %327 = vmatprep.subr.mxu0 0.0
        %328 = vmatpush1.msra.mxu0 %v298
        %329 = vmatprep.subr.mxu0 0.0
        %330 = vmatpush1.msra.mxu0 %v297
        %331 = vmatprep.subr.mxu0 0.0
        %332 = vmatpush1.msra.mxu0 %v296
        %333 = vmatprep.subr.mxu0 0.0
        %334 = vmatpush1.msra.mxu0 %v295
        %335 = vmatprep.subr.mxu0 0.0
        %336 = vmatpush2.msra.mxu0 0.0
        %337 = vmatprep.subr.mxu0 0.0
        %338 = vmatpush2.msra.mxu0 0.0
        %339 = vmatprep.subr.mxu0 0.0
        %340 = vmatpush2.msra.mxu0 0.0
        %341 = vmatprep.subr.mxu0 0.0
        %342 = vmatpush2.msra.mxu0 0.0
        %343 = vmatprep.subr.mxu0 0.0
        %344 = vmatpush2.msra.mxu0 0.0
        %345 = vmatprep.subr.mxu0 0.0
        %346 = vmatpush2.msra.mxu0 0.0
        %347 = vmatprep.subr.mxu0 0.0
        %348 = vmatpush2.msra.mxu0 0.0
        %349 = vmatprep.subr.mxu0 0.0
        %350 = vmatpush2.msra.mxu0 0.0
        %351 = vmatprep.subr.mxu0 0.0
        %352 = vmatpush2.msra.mxu0 0.0
        %353 = vmatprep.subr.mxu0 0.0
        %354 = vmatpush2.msra.mxu0 0.0
        %355 = vmatprep.subr.mxu0 0.0
        %356 = vmatpush2.msra.mxu0 0.0
        %357 = vmatprep.subr.mxu0 0.0
        %358 = vmatpush2.msra.mxu0 0.0
        %359 = vmatprep.subr.mxu0 0.0
        %360 = vmatpush2.msra.mxu0 0.0
        %361 = vmatprep.subr.mxu0 0.0
        %362 = vmatpush2.msra.mxu0 0.0
        %363 = vmatprep.subr.mxu0 0.0
        %364 = vmatpush2.msra.mxu0 0.0
        %365 = vmatprep.subr.mxu0 0.0
        %366 = vmatpush2.msra.mxu0 0.0
        %367 = vmatprep.mubr.f32.mxu0 0.0
        %368 = vmatmul.mubr.f32.gmra.mxu0 %v301
        %v369 = vpop.f32.mrf.mxu0
        %v370 = vadd.f32 0.0, %v369
        %v371 = vpop.f32.mrf.mxu0
        %372 = vdwg.mxu0
        %v374 = vsel %vm299, %v289, 0
        %376 = vmatprep.subr.mxu0 0.0
        %377 = vmatpush1.msra.mxu0 0.0
        %378 = vmatprep.subr.mxu0 0.0
        %379 = vmatpush1.msra.mxu0 0.0
        %380 = vmatprep.subr.mxu0 0.0
        %381 = vmatpush1.msra.mxu0 0.0
        %382 = vmatprep.subr.mxu0 0.0
        %383 = vmatpush1.msra.mxu0 0.0
        %384 = vmatprep.subr.mxu0 0.0
        %385 = vmatpush1.msra.mxu0 0.0
        %386 = vmatprep.subr.mxu0 0.0
        %387 = vmatpush1.msra.mxu0 0.0
        %388 = vmatprep.subr.mxu0 0.0
        %389 = vmatpush1.msra.mxu0 0.0
        %390 = vmatprep.subr.mxu0 0.0
        %391 = vmatpush1.msra.mxu0 0.0
        %392 = vmatprep.subr.mxu0 0.0
        %393 = vmatpush1.msra.mxu0 0.0
        %394 = vmatprep.subr.mxu0 0.0
        %395 = vmatpush1.msra.mxu0 0.0
        %396 = vmatprep.subr.mxu0 0.0
        %397 = vmatpush1.msra.mxu0 0.0
        %398 = vmatprep.subr.mxu0 0.0
        %399 = vmatpush1.msra.mxu0 0.0
        %400 = vmatprep.subr.mxu0 0.0
        %401 = vmatpush1.msra.mxu0 %v293
        %402 = vmatprep.subr.mxu0 0.0
        %403 = vmatpush1.msra.mxu0 %v292
        %404 = vmatprep.subr.mxu0 0.0
        %405 = vmatpush1.msra.mxu0 %v291
        %406 = vmatprep.subr.mxu0 0.0
        %407 = vmatpush1.msra.mxu0 %v290
        %408 = vmatprep.subr.mxu0 0.0
        %409 = vmatpush2.msra.mxu0 0.0
        %410 = vmatprep.subr.mxu0 0.0
        %411 = vmatpush2.msra.mxu0 0.0
        %412 = vmatprep.subr.mxu0 0.0
        %413 = vmatpush2.msra.mxu0 0.0
        %414 = vmatprep.subr.mxu0 0.0
        %415 = vmatpush2.msra.mxu0 0.0
        %416 = vmatprep.subr.mxu0 0.0
        %417 = vmatpush2.msra.mxu0 0.0
        %418 = vmatprep.subr.mxu0 0.0
        %419 = vmatpush2.msra.mxu0 0.0
        %420 = vmatprep.subr.mxu0 0.0
        %421 = vmatpush2.msra.mxu0 0.0
        %422 = vmatprep.subr.mxu0 0.0
        %423 = vmatpush2.msra.mxu0 0.0
        %424 = vmatprep.subr.mxu0 0.0
        %425 = vmatpush2.msra.mxu0 0.0
        %426 = vmatprep.subr.mxu0 0.0
        %427 = vmatpush2.msra.mxu0 0.0
        %428 = vmatprep.subr.mxu0 0.0
        %429 = vmatpush2.msra.mxu0 0.0
        %430 = vmatprep.subr.mxu0 0.0
        %431 = vmatpush2.msra.mxu0 0.0
        %432 = vmatprep.subr.mxu0 0.0
        %433 = vmatpush2.msra.mxu0 0.0
        %434 = vmatprep.subr.mxu0 0.0
        %435 = vmatpush2.msra.mxu0 0.0
        %436 = vmatprep.subr.mxu0 0.0
        %437 = vmatpush2.msra.mxu0 0.0
        %438 = vmatprep.subr.mxu0 0.0
        %439 = vmatpush2.msra.mxu0 0.0
        %440 = vmatprep.mubr.f32.mxu0 0.0
        %441 = vmatmul.mubr.f32.gmra.mxu0 %v374
        %v442 = vpop.f32.mrf.mxu0
        %v443 = vadd.f32 %v370, %v442
        %v444 = vpop.f32.mrf.mxu0
        %445 = vdwg.mxu0
        %v446 = vld [vmem:[%s4] sm:$0x1]
        %v448 = vlaneseq
        %v449 = vshrl.u32 %v448, 7
        %v450 = vsub.s32 0, %v449
        %v451 = vrot.slane %v446, %v450
        %v453 = vadd.f32 %v443, %v451
        %v454 = vmax.f32 %v453, 0.0
        %455 = vst [vmem:[%s281] sm:$0xff] %v454
        %456 = vst.msk [vmem:[#allocation2] sm:$0xff] %vm299, %v454
        %s457 = sand.u32 %s142, 1
        %s458 = scalar_lea.sflag [#allocation5], %s457
        %s459 = sand.u32 %s142, 1
        %s460 = smul.addr %s459, 8
        %s461 = scalar_lea.vmem [#allocation11], %s460
        // Predicated region
        $region61: #{tpu_custom_call.1} parent=39 // pred_check
          %p462 = pneg %p152
        $region62: #{tpu_custom_call.1} parent=39 // pred_check_branch
          %464 = sbr.rel (%p462) target = $region64
        $region63: #{tpu_custom_call.1} parent=39 // pred_region
          %s466 = ssub.s32 128, 128
          %467 = vsyncadd %s458, %s466
          %s468 = smul.addr %s24, 128
          %s469 = scalar_lea.hbm %s5, %s468
          %s471 = sshll.u32 %s461, 4
          %s472 = int_to_ptr.vmem [resolvable:$true] %s471
          %474 = dma.vmem_to_hbm [thread:$0]  %s472, 128, %s469, %s458
        $region64: #{tpu_custom_call.1} parent=39 // pred_fallthru
          _
      $region40: #{tpu_custom_call.1} parent=5 // pred_fallthru
        _
      %p475 = scmp.le.s32.totalorder 2, %s19
      // Predicated region
      $region65: #{tpu_custom_call.1} parent=5 // pred_check
        %p476 = pneg %p475
      $region66: #{tpu_custom_call.1} parent=5 // pred_check_branch
        %478 = sbr.rel (%p476) target = $region68
      $region67: #{tpu_custom_call.1} parent=5 // pred_region
        %s479 = ssub.s32 %s19, 2
        // Predicated region
        $region69: #{tpu_custom_call.1} parent=67 // pred_check
          %p480 = pneg %p158
        $region70: #{tpu_custom_call.1} parent=67 // pred_check_branch
          %482 = sbr.rel (%p480) target = $region72
        $region71: #{tpu_custom_call.1} parent=67 // pred_region
          %s483 = sand.u32 %s143, 1
          %s484 = scalar_lea.sflag [#allocation5], %s483
          %s485 = sand.u32 %s143, 1
          %s486 = smul.addr %s485, 8
          %s487 = scalar_lea.vmem [#allocation11], %s486
          %488 = dma.done %s484, 128
        $region72: #{tpu_custom_call.1} parent=67 // pred_fallthru
          _
      $region68: #{tpu_custom_call.1} parent=5 // pred_fallthru
        _
    $region6: #{tpu_custom_call.1} parent=1 // loop_footer
      %s23 = sadd.s32 1, %s19
    $region7: #{tpu_custom_call.1} parent=1 // loop_footer_branch
      %18 = sbr.rel target = $region3
    $region8: #{tpu_custom_call.1} parent=1 // loop_exit
      _
    %489 = vsyncpa [#allocation4], 1
    %s490 = scalar_lea.sflag [#allocation4], 1
    %491 = vsyncpa %s490, 1
    %492 = vsyncpa [#allocation7], 1
    %493 = vsyncpa [#allocation10], 1
    %494 = vsyncpa [#allocation5], 1
    %s495 = scalar_lea.sflag [#allocation5], 1
    %496 = vsyncpa %s495, 1

</llo_original>
